<compile_context>
chip_gen: v7x
topology: tpu7x:2x2x1
jax: 0.10.0
libtpu: 0.0.40
codegen_flags: <defaults>
</compile_context>

<pallas_src>
import jax
import jax.numpy as jnp
from jax.experimental import pallas as pl
from jax.experimental.pallas import tpu as pltpu

_MIB = 1024 * 1024


def _pick_tile(n, cap, align):
    """Largest tile <= cap that divides n and is a multiple of `align`,
    else the full extent n (full-dim blocks are always legal)."""
    if n <= cap:
        return n
    t = (cap // align) * align
    while t >= align:
        if n % t == 0:
            return t
        t -= align
    return n


def _vmem_capacity_bytes():
    try:
        return int(pltpu.get_tpu_info().vmem_capacity_bytes)
    except Exception:
        return 64 * _MIB  # conservative fallback (v7x per-core VMEM)


def _sigmoid(s, approx):
    e = jnp.exp(-s)                                   # EUP slot
    if approx:
        return pl.reciprocal(1.0 + e, approx=True)    # EUP slot (nearly free)
    return 1.0 / (1.0 + e)                            # precise (f32 bit-parity)


def _make_pinned_kernel(tn, approx):
    # zi_ref: (tm, D) rows of the i-block.
    # zt_ref: (D, N)  whole Z^T, resident in VMEM (constant block index).
    # out   : (tm, tn) block of sigmoid(Z @ Z^T).
    def kernel(zi_ref, zt_ref, out_ref):
        j = pl.program_id(1)
        start = pl.multiple_of(j * tn, tn)
        zt_blk = zt_ref[:, pl.ds(start, tn)]          # lane-aligned slice
        s = jnp.dot(zi_ref[...], zt_blk, preferred_element_type=jnp.float32)
        out_ref[...] = _sigmoid(s, approx).astype(out_ref.dtype)
    return kernel


def _make_stream_kernel(approx):
    def kernel(zi_ref, zt_ref, out_ref):
        s = jnp.dot(zi_ref[...], zt_ref[...], preferred_element_type=jnp.float32)
        out_ref[...] = _sigmoid(s, approx).astype(out_ref.dtype)
    return kernel


def inner_product_decoder(z, *, tm=None, tn=None, out_dtype=jnp.float32,
                          operand_dtype=None, max_resident_z_bytes=None):
    """sigmoid(z @ z.T).reshape(-1), computed with a Pallas TPU kernel.

    FAST PATH: out_dtype=jnp.bfloat16 halves the dominant N^2 output write
    stream (outputs are probabilities in [0, 1]); the default f32 keeps
    bit-parity with the torch module.  operand_dtype=jnp.bfloat16 optionally
    halves Z reads / pin footprint (accumulation stays f32).
    """
    n, d = z.shape
    if operand_dtype is not None:
        z = z.astype(operand_dtype)
    zt = z.T                      # one-time (D, N) transpose in the wrapper

    auto_tm = tm is None
    if tm is None:
        tm = _pick_tile(n, 512, align=8)       # sublane axis
    if tn is None:
        tn = _pick_tile(n, 2048, align=128)    # output lane axis (wide vst)
    # v7x has 2 TensorCores: keep >= 2 row blocks so "parallel" sharding pays.
    if auto_tm and tm == n and tn == n and n % 16 == 0:
        tm = n // 2
    assert n % tm == 0 and n % tn == 0, "N must be divisible by the tile sizes"
    assert tm % 8 == 0 or tm == n
    assert tn % 128 == 0 or tn == n
    # TODO(synk): general (ragged) N would need padding or masked edge tiles.

    op_isz = z.dtype.itemsize
    out_isz = jnp.dtype(out_dtype).itemsize
    approx = out_isz < 4          # approx EUP recip hides under bf16 rounding

    usable_vmem = min(3 * _vmem_capacity_bytes() // 4, 96 * _MIB)
    if max_resident_z_bytes is None:
        # Generation-aware pin threshold (~16 MiB on v7x, ~24 MiB on v5e/v6e).
        max_resident_z_bytes = min(24 * _MIB, usable_vmem // 3)
    pin_z = op_isz * n * d <= max_resident_z_bytes

    out_buf = 2 * tm * tn * out_isz                    # double-buffered output
    zi_buf = 2 * tm * d * op_isz                       # double-buffered rows
    zt_buf = (n * d * op_isz) if pin_z else (2 * d * tn * op_isz)
    needed = out_buf + zi_buf + zt_buf
    vmem_limit = int(min(usable_vmem, max(2 * needed, 32 * _MIB)))

    if pin_z:
        # zT read once; zi row blocks read once each (once per i-row).
        z_read_bytes = 2 * n * d * op_isz
    else:
        # Column blocks read once each; row blocks re-read once per column block.
        z_read_bytes = n * d * op_isz + (n // tn) * n * d * op_isz
    cost = pl.CostEstimate(
        flops=2 * n * n * d,
        transcendentals=n * n,
        bytes_accessed=z_read_bytes + n * n * out_isz,
    )

    if pin_z:
        # j innermost: the zi row block (index (i, 0)) is DMA'd once per i-row;
        # zT is resident whole (constant index + Buffered(1) -> DMA'd once).
        grid = (n // tm, n // tn)
        in_specs = [
            pl.BlockSpec((tm, d), lambda i, j: (i, 0)),
            pl.BlockSpec((d, n), lambda i, j: (0, 0),
                         pipeline_mode=pl.Buffered(1)),
        ]
        out_specs = pl.BlockSpec((tm, tn), lambda i, j: (i, j))
        kernel = _make_pinned_kernel(tn, approx)
    else:
        # i innermost: the big (D, tn) column block stays resident across the
        # inner axis, so Z columns are fetched from HBM exactly once in total.
        grid = (n // tn, n // tm)
        in_specs = [
            pl.BlockSpec((tm, d), lambda j, i: (i, 0)),
            pl.BlockSpec((d, tn), lambda j, i: (0, j)),
        ]
        out_specs = pl.BlockSpec((tm, tn), lambda j, i: (i, j))
        kernel = _make_stream_kernel(approx)

    gram = pl.pallas_call(
        kernel,
        out_shape=jax.ShapeDtypeStruct((n, n), out_dtype),
        grid_spec=pltpu.PrefetchScalarGridSpec(
            num_scalar_prefetch=0,
            grid=grid,
            in_specs=in_specs,
            out_specs=out_specs,
        ),
        compiler_params=pltpu.CompilerParams(
            dimension_semantics=("parallel", "parallel"),
            vmem_limit_bytes=vmem_limit,
        ),
        cost_estimate=cost,
    )(z, zt)

    # Flatten to 1-D (matches `x.view(-1)`); free for a contiguous (N, N) array.
    return gram.reshape(-1)


if __name__ == "__main__":
    # InnerProductDecoder has no learnable parameters (act = sigmoid).
    key = jax.random.PRNGKey(0)
    N, D = 256, 64  # small node-embedding matrix (N nodes, D latent dims)
    z = jax.random.normal(key, (N, D), dtype=jnp.float32)

    ref = jax.nn.sigmoid(z @ z.T).reshape(-1)

    # Bit-parity path: f32 output, pinned Z^T, lane-dense tiles.
    out = jax.block_until_ready(inner_product_decoder(z))
    assert out.shape == (N * N,)
    assert jnp.allclose(out, ref, atol=1e-5, rtol=1e-5)

    # Fast path: bf16 output halves the dominant N^2 write stream.
    out_bf16 = jax.block_until_ready(
        inner_product_decoder(z, out_dtype=jnp.bfloat16))
    assert jnp.allclose(out_bf16.astype(jnp.float32), ref, atol=5e-3, rtol=5e-3)

    # Multi-block pinned path (exercises in-kernel pl.ds slicing of resident Z^T).
    out2 = jax.block_until_ready(inner_product_decoder(z, tm=128, tn=128))
    assert jnp.allclose(out2, ref, atol=1e-5, rtol=1e-5)

    # Streaming fallback path (as if Z were too large to pin in VMEM).
    out3 = jax.block_until_ready(
        inner_product_decoder(z, tm=128, tn=128, max_resident_z_bytes=0))
    assert jnp.allclose(out3, ref, atol=1e-5, rtol=1e-5)

    print("KERNEL_OK")
</pallas_src>

<mosaic_0001>
module attributes {stable_mosaic.version = 11 : i64} {
  func.func @kernel(%arg0: i32, %arg1: i32, %arg2: memref<128x64xf32, #tpu.memory_space<vmem>>, %arg3: memref<64x256xf32, #tpu.memory_space<vmem>>, %arg4: memref<128x256xf32, #tpu.memory_space<vmem>>) attributes {dimension_semantics = [#tpu.dimension_semantics<parallel>, #tpu.dimension_semantics<parallel>], iteration_bounds = array<i64: 2, 1>, scalar_prefetch = 0 : i64, scratch_operands = 0 : i64, tpu.core_type = #tpu.core_type<tc>, window_params = [{transform_indices = @transform_0, window_bounds = array<i64: 128, 64>}, {pipeline_mode = #tpu.pipeline_mode<synchronous>, transform_indices = @transform_1, window_bounds = array<i64: 64, 256>}, {transform_indices = @transform_2, window_bounds = array<i64: 128, 256>}]} {
    %c256_i32 = arith.constant 256 : i32
    %0 = arith.muli %arg1, %c256_i32 : i32
    %1 = tpu.assume_multiple %0, 256 : i32
    %c0 = arith.constant 0 : index
    %2 = arith.index_cast %1 : i32 to index
    %3 = vector.load %arg3[%c0, %2] : memref<64x256xf32, #tpu.memory_space<vmem>>, vector<64x256xf32>
    %c0_0 = arith.constant 0 : index
    %c0_1 = arith.constant 0 : index
    %4 = vector.load %arg2[%c0_0, %c0_1] : memref<128x64xf32, #tpu.memory_space<vmem>>, vector<128x64xf32>
    %cst = arith.constant dense<0.000000e+00> : vector<128x256xf32>
    %5 = tpu.matmul %4, %3, %cst {dimension_numbers = #tpu.dot_dimension_numbers<[1], [0], [0], [1], [0, 0, 1, 1], [], []>} : vector<128x64xf32>, vector<64x256xf32>, vector<128x256xf32> -> vector<128x256xf32>
    %cst_2 = arith.constant 0.000000e+00 : f32
    %6 = vector.broadcast %cst_2 : f32 to vector<128x256xf32>
    %7 = arith.subf %6, %5 : vector<128x256xf32>
    %8 = math.exp %7 : vector<128x256xf32>
    %cst_3 = arith.constant 1.000000e+00 : f32
    %9 = vector.broadcast %cst_3 : f32 to vector<128x256xf32>
    %10 = arith.addf %9, %8 : vector<128x256xf32>
    %cst_4 = arith.constant 1.000000e+00 : f32
    %11 = vector.broadcast %cst_4 : f32 to vector<128x256xf32>
    %12 = arith.divf %11, %10 : vector<128x256xf32>
    %c0_5 = arith.constant 0 : index
    %c0_6 = arith.constant 0 : index
    %13 = vector.load %arg4[%c0_5, %c0_6] : memref<128x256xf32, #tpu.memory_space<vmem>>, vector<128x256xf32>
    tpu.vector_store %arg4[%c0_5, %c0_6], %12 {strides = array<i32>} : memref<128x256xf32, #tpu.memory_space<vmem>>, vector<128x256xf32>,
    return
  }
  func.func @transform_0(%arg0: i32, %arg1: i32) -> (i32, i32) {
    %c0_i32 = arith.constant 0 : i32
    %c0_i32_0 = arith.constant 0 : i32
    return %arg0, %c0_i32 : i32, i32
  }
  func.func @transform_1(%arg0: i32, %arg1: i32) -> (i32, i32) {
    %c0_i32 = arith.constant 0 : i32
    %c0_i32_0 = arith.constant 0 : i32
    %c0_i32_1 = arith.constant 0 : i32
    return %c0_i32, %c0_i32_0 : i32, i32
  }
  func.func @transform_2(%arg0: i32, %arg1: i32) -> (i32, i32) {
    %c0_i32 = arith.constant 0 : i32
    return %arg0, %arg1 : i32, i32
  }
}

</mosaic_0001>

<llo_original>
// kernel: tpu_custom_call.1
$region0: #{tpu_custom_call.1}
  #allocation0 [shape = 'u32[]', space=smem, size = 0x4, offset = 0x4, fixed_abs, tag = 'smem constant byte address 0x4 - core index']
  #allocation1 [shape = 'u32[144,128]{1,0:T(1,128)}', space=vmem, size = 0x12000, scoped, tag = 'internal scratch']
  %s0 = inlined_call_operand.vmem [shape: f32[256,64], index: 0, kind: input, shape index: {}]
  %s1 = inlined_call_operand.vmem [shape: f32[64,256], index: 1, kind: input, shape index: {}]
  %s2 = inlined_call_operand.hbm [shape: f32[256,256], index: 2, kind: output, shape index: {}]
  %s3 = sld [smem:[#allocation0]]
  $region41: #{tpu_custom_call.1} parent=0
    _
  %s5 = ssub.s32 1, %s3
  %s6 = scalar_select 0, %s5, %s3
  $region1: #{tpu_custom_call.1} parent=0
    #allocation2 [shape = 'u8[262144]{0}', space=vmem, size = 0x40000, scoped, tag = 'output window, operand 0']
    #allocation3 [shape = 's32[2]{0}', space=sflag, size = 0x8, scoped, tag = 'scoped memory for tpu_custom_call.1']
    %7 = vsyncpa [#allocation3], 0
    %s8 = scalar_lea.sflag [#allocation3], 1
    %9 = vsyncpa %s8, 0
    loop: start=0, step=1, limit=4
    $region2: #{tpu_custom_call.1} parent=1 // loop_pre_header
      _
    $region3: #{tpu_custom_call.1} parent=1 // loop_header
      %s11 = sphi 0, %s15
      %p12 = scmp.ge.s32.totalorder %s11, 4
      %s18 = sphi 0, %s30
      %s19 = sphi 0, %s26
      %s20 = sphi 0, %s18
      %s21 = sphi 0, %s19
      %s22 = sphi 0, %s20
      %s23 = sphi 0, %s21
      %s33 = sphi 0, %s35
      %s36 = sphi 0, %s33
      %s37 = sphi 0, %s36
      %s53 = sphi 0, %s37
      %s57 = sphi 0, %s57
      %s59 = sphi 0, %s57
      %s60 = sphi 0, %s59
      %s74 = sphi 0, %s60
      %s82 = sphi 0, %s84
      %s85 = sphi 0, %s82
      %s86 = sphi 0, %s85
      %s102 = sphi 0, %s86
    $region4: #{tpu_custom_call.1} parent=1 // loop_header_branch
      %14 = sbr.rel (%p12) target = $region8
    $region5: #{tpu_custom_call.1} parent=1 // loop_body
      %s16 = ssub.s32 %s11, 1
      %s17 = ssub.s32 %s11, 2
      %s24 = sadd.s32 1, %s19
      %p25 = scmp.ge.s32.totalorder %s24, 1
      %s26 = scalar_select %p25, 0, %s24
      %s27 = sadd.s32 1, %s18
      %s28 = scalar_select %p25, %s27, %s18
      %p29 = scmp.ge.s32.totalorder %s28, 2
      %s30 = scalar_select %p29, 0, %s28
      %s31 = ssub.s32 %s18, %s30
      %p32 = scmp.eq.s32.totalorder %s31, 0
      %s34 = sadd.s32 %s33, 1
      %s35 = scalar_select %p32, %s33, %s34
      %p38 = pneg %p32
      %p39 = scmp.eq.s32.totalorder %s11, 1
      %p40 = por %p38, %p39
      %p41 = scmp.ne.s32.totalorder %s33, %s36
      %p42 = scmp.eq.s32.totalorder %s11, 0
      %p43 = por %p41, %p42
      %p44 = scmp.ne.s32.totalorder %s33, %s36
      %p45 = scmp.eq.s32.totalorder %s16, 1
      %p46 = por %p44, %p45
      %p47 = scmp.ne.s32.totalorder %s36, %s37
      %p48 = scmp.eq.s32.totalorder %s16, 0
      %p49 = por %p47, %p48
      %p50 = scmp.ne.s32.totalorder %s36, %s37
      %p51 = scmp.eq.s32.totalorder %s17, 1
      %p52 = por %p50, %p51
      %p54 = scmp.ne.s32.totalorder %s37, %s53
      %p55 = scmp.eq.s32.totalorder %s17, 0
      %p56 = por %p54, %p55
      %s58 = sadd.s32 %s57, 1
      %p61 = scmp.eq.s32.totalorder %s11, 1
      %p62 = scmp.ne.s32.totalorder %s57, %s59
      %p63 = scmp.eq.s32.totalorder %s11, 0
      %p64 = por %p62, %p63
      %p65 = scmp.ne.s32.totalorder %s57, %s59
      %p66 = scmp.eq.s32.totalorder %s16, 1
      %p67 = por %p65, %p66
      %p68 = scmp.ne.s32.totalorder %s59, %s60
      %p69 = scmp.eq.s32.totalorder %s16, 0
      %p70 = por %p68, %p69
      %p71 = scmp.ne.s32.totalorder %s59, %s60
      %p72 = scmp.eq.s32.totalorder %s17, 1
      %p73 = por %p71, %p72
      %p75 = scmp.ne.s32.totalorder %s60, %s74
      %p76 = scmp.eq.s32.totalorder %s17, 0
      %p77 = por %p75, %p76
      %s78 = ssub.s32 %s18, %s30
      %s79 = ssub.s32 %s19, %s26
      %s80 = sor.u32 %s78, %s79
      %p81 = scmp.eq.s32.totalorder %s80, 0
      %s83 = sadd.s32 %s82, 1
      %s84 = scalar_select %p81, %s82, %s83
      %p87 = pneg %p81
      %p88 = scmp.eq.s32.totalorder %s11, 1
      %p89 = por %p87, %p88
      %p90 = scmp.ne.s32.totalorder %s82, %s85
      %p91 = scmp.eq.s32.totalorder %s11, 0
      %p92 = por %p90, %p91
      %p93 = scmp.ne.s32.totalorder %s82, %s85
      %p94 = scmp.eq.s32.totalorder %s16, 1
      %p95 = por %p93, %p94
      %p96 = scmp.ne.s32.totalorder %s85, %s86
      %p97 = scmp.eq.s32.totalorder %s16, 0
      %p98 = por %p96, %p97
      %p99 = scmp.ne.s32.totalorder %s85, %s86
      %p100 = scmp.eq.s32.totalorder %s17, 1
      %p101 = por %p99, %p100
      %p103 = scmp.ne.s32.totalorder %s86, %s102
      %p104 = scmp.eq.s32.totalorder %s17, 0
      %p105 = por %p103, %p104
      %p106 = scmp.le.s32.totalorder 1, %s11
      %p107 = scmp.lt.s32.totalorder %s11, 3
      %p108 = pnand %p106, %p107
      %p109 = pneg %p108
      // Predicated region
      $region9: #{tpu_custom_call.1} parent=5 // pred_check
        _
      $region10: #{tpu_custom_call.1} parent=5 // pred_check_branch
        %111 = sbr.rel (%p108) target = $region12
      $region11: #{tpu_custom_call.1} parent=5 // pred_region
        %s112 = ssub.s32 %s11, 1
        // Predicated region
        $region13: #{tpu_custom_call.1} parent=11 // pred_check
          %p113 = pneg %p70
        $region14: #{tpu_custom_call.1} parent=11 // pred_check_branch
          %115 = sbr.rel (%p113) target = $region16
        $region15: #{tpu_custom_call.1} parent=11 // pred_region
          _
        $region16: #{tpu_custom_call.1} parent=11 // pred_fallthru
          _
      $region12: #{tpu_custom_call.1} parent=5 // pred_fallthru
        _
      %p116 = scmp.lt.s32.totalorder %s11, 2
      // Predicated region
      $region17: #{tpu_custom_call.1} parent=5 // pred_check
        %p117 = pneg %p116
      $region18: #{tpu_custom_call.1} parent=5 // pred_check_branch
        %119 = sbr.rel (%p117) target = $region20
      $region19: #{tpu_custom_call.1} parent=5 // pred_region
        // Predicated region
        $region21: #{tpu_custom_call.1} parent=19 // pred_check
          %p120 = pneg %p43
        $region22: #{tpu_custom_call.1} parent=19 // pred_check_branch
          %122 = sbr.rel (%p120) target = $region24
        $region23: #{tpu_custom_call.1} parent=19 // pred_region
          %s123 = smul.u32 16, %s18
          %p124 = scmp.lt.s32.totalorder %s123, 31
          %s125 = scalar_select %p124, %s123, 31
          %s126 = smul.addr %s125, 8
          %s127 = scalar_lea.vmem %s0, %s126
          %s128 = smul.u32 16, %s18
        $region24: #{tpu_custom_call.1} parent=19 // pred_fallthru
          _
      $region20: #{tpu_custom_call.1} parent=5 // pred_fallthru
        _
      %p129 = scmp.le.s32.totalorder 1, %s11
      %p130 = scmp.lt.s32.totalorder %s11, 3
      %p131 = pnand %p129, %p130
      %p132 = pneg %p131
      // Predicated region
      $region25: #{tpu_custom_call.1} parent=5 // pred_check
        _
      $region26: #{tpu_custom_call.1} parent=5 // pred_check_branch
        %134 = sbr.rel (%p131) target = $region28
      $region27: #{tpu_custom_call.1} parent=5 // pred_region
        %s135 = ssub.s32 %s11, 1
        %s136 = smul.u32 16, %s20
        %p137 = scmp.lt.s32.totalorder %s136, 31
        %s138 = scalar_select %p137, %s136, 31
        %s139 = smul.addr %s138, 8
        %s140 = scalar_lea.vmem %s0, %s139
        %p141 = pneg %p49
        %p142 = pneg %p46
        %p143 = pneg %p70
        %p144 = pneg %p67
        %p145 = pneg %p98
        %p146 = pneg %p95
        %s147 = sand.u32 %s85, 1
        %s148 = scalar_lea.sflag [#allocation3], %s147
        %s149 = sand.u32 %s85, 1
        %s150 = smul.addr %s149, 256
        %s151 = scalar_lea.vmem [#allocation2], %s150
        %s152 = smul.u32 16, %s20
        %p153 = scmp.lt.s32.totalorder %s152, 31
        %s154 = scalar_select %p153, %s152, 31
        %s155 = smul.addr %s154, 8
        %s156 = scalar_lea.vmem %s0, %s155
        %s157 = smul.u32 16, %s20
        %s158 = smul.u32 16, %s20
        %s159 = smul.u32 2, %s21
        %s160 = smul.u32 %s21, 256
        %s161 = sshra.s32 %s160, 7
        %s162 = sand.u32 %s160, 127
        %s163 = smul.addr %s161, 8
        %s164 = scalar_lea.vmem %s1, %s163
        %v165 = vld [vmem:[%s164] sm:$0xff]
        %v166 = vld [vmem:[%s164 + $0x8] sm:$0xff]
        %v167 = vld [vmem:[%s164 + $0x10] sm:$0xff]
        %v168 = vld [vmem:[%s164 + $0x18] sm:$0xff]
        %v169 = vld [vmem:[%s164 + $0x20] sm:$0xff]
        %v170 = vld [vmem:[%s164 + $0x28] sm:$0xff]
        %v171 = vld [vmem:[%s164 + $0x30] sm:$0xff]
        %v172 = vld [vmem:[%s164 + $0x38] sm:$0xff]
        %v173 = vld [vmem:[%s164 + $0x40] sm:$0xff]
        %v174 = vld [vmem:[%s164 + $0x48] sm:$0xff]
        %v175 = vld [vmem:[%s164 + $0x50] sm:$0xff]
        %v176 = vld [vmem:[%s164 + $0x58] sm:$0xff]
        %v177 = vld [vmem:[%s164 + $0x60] sm:$0xff]
        %v178 = vld [vmem:[%s164 + $0x68] sm:$0xff]
        %v179 = vld [vmem:[%s164 + $0x70] sm:$0xff]
        %v180 = vld [vmem:[%s164 + $0x78] sm:$0xff]
        %v181 = vld [vmem:[%s156] sm:$0xff]
        %v182 = vld [vmem:[%s156 + $0x8] sm:$0xff]
        %v183 = vld [vmem:[%s156 + $0x10] sm:$0xff]
        %v184 = vld [vmem:[%s156 + $0x18] sm:$0xff]
        %v185 = vld [vmem:[%s156 + $0x20] sm:$0xff]
        %v186 = vld [vmem:[%s156 + $0x28] sm:$0xff]
        %v187 = vld [vmem:[%s156 + $0x30] sm:$0xff]
        %v188 = vld [vmem:[%s156 + $0x38] sm:$0xff]
        %v189 = vld [vmem:[%s156 + $0x40] sm:$0xff]
        %v190 = vld [vmem:[%s156 + $0x48] sm:$0xff]
        %v191 = vld [vmem:[%s156 + $0x50] sm:$0xff]
        %v192 = vld [vmem:[%s156 + $0x58] sm:$0xff]
        %v193 = vld [vmem:[%s156 + $0x60] sm:$0xff]
        %v194 = vld [vmem:[%s156 + $0x68] sm:$0xff]
        %v195 = vld [vmem:[%s156 + $0x70] sm:$0xff]
        %v196 = vld [vmem:[%s156 + $0x78] sm:$0xff]
        %vm197 = vcmask 523264
        %v199 = vsel %vm197, %v181, 0
        %v202 = vsel %vm197, %v182, 0
        %v205 = vsel %vm197, %v183, 0
        %v208 = vsel %vm197, %v184, 0
        %v211 = vsel %vm197, %v185, 0
        %v214 = vsel %vm197, %v186, 0
        %v217 = vsel %vm197, %v187, 0
        %v220 = vsel %vm197, %v188, 0
        %v223 = vsel %vm197, %v189, 0
        %v226 = vsel %vm197, %v190, 0
        %v229 = vsel %vm197, %v191, 0
        %v232 = vsel %vm197, %v192, 0
        %v235 = vsel %vm197, %v193, 0
        %v238 = vsel %vm197, %v194, 0
        %v241 = vsel %vm197, %v195, 0
        %v244 = vsel %vm197, %v196, 0
        %246 = vmatprep.subr.mxu0 %v166
        %247 = vmatpush1.msra.mxu0 %v165
        %248 = vmatprep.subr.mxu0 %v168
        %249 = vmatpush1.msra.mxu0 %v167
        %250 = vmatprep.subr.mxu0 %v170
        %251 = vmatpush1.msra.mxu0 %v169
        %252 = vmatprep.subr.mxu0 %v172
        %253 = vmatpush1.msra.mxu0 %v171
        %254 = vmatprep.subr.mxu0 %v174
        %255 = vmatpush1.msra.mxu0 %v173
        %256 = vmatprep.subr.mxu0 %v176
        %257 = vmatpush1.msra.mxu0 %v175
        %258 = vmatprep.subr.mxu0 %v178
        %259 = vmatpush1.msra.mxu0 %v177
        %260 = vmatprep.subr.mxu0 %v180
        %261 = vmatpush1.msra.mxu0 %v179
        %262 = vmatprep.subr.mxu0 0.0
        %263 = vmatpush1.msra.mxu0 0.0
        %264 = vmatprep.subr.mxu0 0.0
        %265 = vmatpush1.msra.mxu0 0.0
        %266 = vmatprep.subr.mxu0 0.0
        %267 = vmatpush1.msra.mxu0 0.0
        %268 = vmatprep.subr.mxu0 0.0
        %269 = vmatpush1.msra.mxu0 0.0
        %270 = vmatprep.subr.mxu0 0.0
        %271 = vmatpush1.msra.mxu0 0.0
        %272 = vmatprep.subr.mxu0 0.0
        %273 = vmatpush1.msra.mxu0 0.0
        %274 = vmatprep.subr.mxu0 0.0
        %275 = vmatpush1.msra.mxu0 0.0
        %276 = vmatprep.subr.mxu0 0.0
        %277 = vmatpush1.msra.mxu0 0.0
        %278 = vmatprep.subr.mxu0 0.0
        %279 = vmatpush1.msra.mxu0 0.0
        %280 = vmatprep.subr.mxu0 0.0
        %281 = vmatpush1.msra.mxu0 0.0
        %282 = vmatprep.subr.mxu0 0.0
        %283 = vmatpush1.msra.mxu0 0.0
        %284 = vmatprep.subr.mxu0 0.0
        %285 = vmatpush1.msra.mxu0 0.0
        %286 = vmatprep.subr.mxu0 0.0
        %287 = vmatpush1.msra.mxu0 0.0
        %288 = vmatprep.subr.mxu0 0.0
        %289 = vmatpush1.msra.mxu0 0.0
        %290 = vmatprep.subr.mxu0 0.0
        %291 = vmatpush1.msra.mxu0 0.0
        %292 = vmatprep.subr.mxu0 0.0
        %293 = vmatpush1.msra.mxu0 0.0
        %294 = vmatprep.subr.mxu0 0.0
        %295 = vmatpush1.msra.mxu0 0.0
        %296 = vmatprep.subr.mxu0 0.0
        %297 = vmatpush1.msra.mxu0 0.0
        %298 = vmatprep.subr.mxu0 0.0
        %299 = vmatpush1.msra.mxu0 0.0
        %300 = vmatprep.subr.mxu0 0.0
        %301 = vmatpush1.msra.mxu0 0.0
        %302 = vmatprep.subr.mxu0 0.0
        %303 = vmatpush1.msra.mxu0 0.0
        %304 = vmatprep.subr.mxu0 0.0
        %305 = vmatpush1.msra.mxu0 0.0
        %306 = vmatprep.subr.mxu0 0.0
        %307 = vmatpush1.msra.mxu0 0.0
        %308 = vmatprep.subr.mxu0 0.0
        %309 = vmatpush1.msra.mxu0 0.0
        %310 = vmatprep.mubr.f32.mxu0 0.0
        %311 = vmatmul.mubr.f32.gmra.mrb[0].mxu0 %v199
        %v312 = vpop.f32.mrb[0].mxu0
        %v313 = vadd.f32 0.0, %v312
        %v314 = vpop.f32.mrb[0].mxu0
        %v315 = vadd.f32 0.0, %v314
        %316 = vmatprep.mubr.f32.mxu0 0.0
        %317 = vmatmul.mubr.f32.gmra.mrb[0].mxu0 %v202
        %v318 = vpop.f32.mrb[0].mxu0
        %v319 = vadd.f32 0.0, %v318
        %v320 = vpop.f32.mrb[0].mxu0
        %v321 = vadd.f32 0.0, %v320
        %322 = vmatprep.mubr.f32.mxu0 0.0
        %323 = vmatmul.mubr.f32.gmra.mrb[0].mxu0 %v205
        %v324 = vpop.f32.mrb[0].mxu0
        %v325 = vadd.f32 0.0, %v324
        %v326 = vpop.f32.mrb[0].mxu0
        %v327 = vadd.f32 0.0, %v326
        %328 = vmatprep.mubr.f32.mxu0 0.0
        %329 = vmatmul.mubr.f32.gmra.mrb[0].mxu0 %v208
        %v330 = vpop.f32.mrb[0].mxu0
        %v331 = vadd.f32 0.0, %v330
        %v332 = vpop.f32.mrb[0].mxu0
        %v333 = vadd.f32 0.0, %v332
        %334 = vmatprep.mubr.f32.mxu0 0.0
        %335 = vmatmul.mubr.f32.gmra.mrb[0].mxu0 %v211
        %v336 = vpop.f32.mrb[0].mxu0
        %v337 = vadd.f32 0.0, %v336
        %v338 = vpop.f32.mrb[0].mxu0
        %v339 = vadd.f32 0.0, %v338
        %340 = vmatprep.mubr.f32.mxu0 0.0
        %341 = vmatmul.mubr.f32.gmra.mrb[0].mxu0 %v214
        %v342 = vpop.f32.mrb[0].mxu0
        %v343 = vadd.f32 0.0, %v342
        %v344 = vpop.f32.mrb[0].mxu0
        %v345 = vadd.f32 0.0, %v344
        %346 = vmatprep.mubr.f32.mxu0 0.0
        %347 = vmatmul.mubr.f32.gmra.mrb[0].mxu0 %v217
        %v348 = vpop.f32.mrb[0].mxu0
        %v349 = vadd.f32 0.0, %v348
        %v350 = vpop.f32.mrb[0].mxu0
        %v351 = vadd.f32 0.0, %v350
        %352 = vmatprep.mubr.f32.mxu0 0.0
        %353 = vmatmul.mubr.f32.gmra.mrb[0].mxu0 %v220
        %v354 = vpop.f32.mrb[0].mxu0
        %v355 = vadd.f32 0.0, %v354
        %v356 = vpop.f32.mrb[0].mxu0
        %v357 = vadd.f32 0.0, %v356
        %358 = vmatprep.mubr.f32.mxu0 0.0
        %359 = vmatmul.mubr.f32.gmra.mrb[0].mxu0 %v223
        %v360 = vpop.f32.mrb[0].mxu0
        %v361 = vadd.f32 0.0, %v360
        %v362 = vpop.f32.mrb[0].mxu0
        %v363 = vadd.f32 0.0, %v362
        %364 = vmatprep.mubr.f32.mxu0 0.0
        %365 = vmatmul.mubr.f32.gmra.mrb[0].mxu0 %v226
        %v366 = vpop.f32.mrb[0].mxu0
        %v367 = vadd.f32 0.0, %v366
        %v368 = vpop.f32.mrb[0].mxu0
        %v369 = vadd.f32 0.0, %v368
        %370 = vmatprep.mubr.f32.mxu0 0.0
        %371 = vmatmul.mubr.f32.gmra.mrb[0].mxu0 %v229
        %v372 = vpop.f32.mrb[0].mxu0
        %v373 = vadd.f32 0.0, %v372
        %v374 = vpop.f32.mrb[0].mxu0
        %v375 = vadd.f32 0.0, %v374
        %376 = vmatprep.mubr.f32.mxu0 0.0
        %377 = vmatmul.mubr.f32.gmra.mrb[0].mxu0 %v232
        %v378 = vpop.f32.mrb[0].mxu0
        %v379 = vadd.f32 0.0, %v378
        %v380 = vpop.f32.mrb[0].mxu0
        %v381 = vadd.f32 0.0, %v380
        %382 = vmatprep.mubr.f32.mxu0 0.0
        %383 = vmatmul.mubr.f32.gmra.mrb[0].mxu0 %v235
        %v384 = vpop.f32.mrb[0].mxu0
        %v385 = vadd.f32 0.0, %v384
        %v386 = vpop.f32.mrb[0].mxu0
        %v387 = vadd.f32 0.0, %v386
        %388 = vmatprep.mubr.f32.mxu0 0.0
        %389 = vmatmul.mubr.f32.gmra.mrb[0].mxu0 %v238
        %v390 = vpop.f32.mrb[0].mxu0
        %v391 = vadd.f32 0.0, %v390
        %v392 = vpop.f32.mrb[0].mxu0
        %v393 = vadd.f32 0.0, %v392
        %394 = vmatprep.mubr.f32.mxu0 0.0
        %395 = vmatmul.mubr.f32.gmra.mrb[0].mxu0 %v241
        %v396 = vpop.f32.mrb[0].mxu0
        %v397 = vadd.f32 0.0, %v396
        %v398 = vpop.f32.mrb[0].mxu0
        %v399 = vadd.f32 0.0, %v398
        %400 = vmatprep.mubr.f32.mxu0 0.0
        %401 = vmatmul.mubr.f32.gmra.mrb[0].mxu0 %v244
        %v402 = vpop.f32.mrb[0].mxu0
        %v403 = vadd.f32 0.0, %v402
        %v404 = vpop.f32.mrb[0].mxu0
        %v405 = vadd.f32 0.0, %v404
        %406 = vdwg.mxu0
        %v407 = vsub.f32 0.0, %v313
        %v408 = vsub.f32 0.0, %v315
        %v409 = vsub.f32 0.0, %v319
        %v410 = vsub.f32 0.0, %v321
        %v411 = vsub.f32 0.0, %v325
        %v412 = vsub.f32 0.0, %v327
        %v413 = vsub.f32 0.0, %v331
        %v414 = vsub.f32 0.0, %v333
        %v415 = vsub.f32 0.0, %v337
        %v416 = vsub.f32 0.0, %v339
        %v417 = vsub.f32 0.0, %v343
        %v418 = vsub.f32 0.0, %v345
        %v419 = vsub.f32 0.0, %v349
        %v420 = vsub.f32 0.0, %v351
        %v421 = vsub.f32 0.0, %v355
        %v422 = vsub.f32 0.0, %v357
        %v423 = vsub.f32 0.0, %v361
        %v424 = vsub.f32 0.0, %v363
        %v425 = vsub.f32 0.0, %v367
        %v426 = vsub.f32 0.0, %v369
        %v427 = vsub.f32 0.0, %v373
        %v428 = vsub.f32 0.0, %v375
        %v429 = vsub.f32 0.0, %v379
        %v430 = vsub.f32 0.0, %v381
        %v431 = vsub.f32 0.0, %v385
        %v432 = vsub.f32 0.0, %v387
        %v433 = vsub.f32 0.0, %v391
        %v434 = vsub.f32 0.0, %v393
        %v435 = vsub.f32 0.0, %v397
        %v436 = vsub.f32 0.0, %v399
        %v437 = vsub.f32 0.0, %v403
        %v438 = vsub.f32 0.0, %v405
        %v439 = vmul.f32 %v407, 1.442695
        %v440 = vpow.pop %v439
        %v441 = vmul.f32 %v408, 1.442695
        %v442 = vpow.pop %v441
        %v443 = vmul.f32 %v409, 1.442695
        %v444 = vpow.pop %v443
        %v445 = vmul.f32 %v410, 1.442695
        %v446 = vpow.pop %v445
        %v447 = vmul.f32 %v411, 1.442695
        %v448 = vpow.pop %v447
        %v449 = vmul.f32 %v412, 1.442695
        %v450 = vpow.pop %v449
        %v451 = vmul.f32 %v413, 1.442695
        %v452 = vpow.pop %v451
        %v453 = vmul.f32 %v414, 1.442695
        %v454 = vpow.pop %v453
        %v455 = vmul.f32 %v415, 1.442695
        %v456 = vpow.pop %v455
        %v457 = vmul.f32 %v416, 1.442695
        %v458 = vpow.pop %v457
        %v459 = vmul.f32 %v417, 1.442695
        %v460 = vpow.pop %v459
        %v461 = vmul.f32 %v418, 1.442695
        %v462 = vpow.pop %v461
        %v463 = vmul.f32 %v419, 1.442695
        %v464 = vpow.pop %v463
        %v465 = vmul.f32 %v420, 1.442695
        %v466 = vpow.pop %v465
        %v467 = vmul.f32 %v421, 1.442695
        %v468 = vpow.pop %v467
        %v469 = vmul.f32 %v422, 1.442695
        %v470 = vpow.pop %v469
        %v471 = vmul.f32 %v423, 1.442695
        %v472 = vpow.pop %v471
        %v473 = vmul.f32 %v424, 1.442695
        %v474 = vpow.pop %v473
        %v475 = vmul.f32 %v425, 1.442695
        %v476 = vpow.pop %v475
        %v477 = vmul.f32 %v426, 1.442695
        %v478 = vpow.pop %v477
        %v479 = vmul.f32 %v427, 1.442695
        %v480 = vpow.pop %v479
        %v481 = vmul.f32 %v428, 1.442695
        %v482 = vpow.pop %v481
        %v483 = vmul.f32 %v429, 1.442695
        %v484 = vpow.pop %v483
        %v485 = vmul.f32 %v430, 1.442695
        %v486 = vpow.pop %v485
        %v487 = vmul.f32 %v431, 1.442695
        %v488 = vpow.pop %v487
        %v489 = vmul.f32 %v432, 1.442695
        %v490 = vpow.pop %v489
        %v491 = vmul.f32 %v433, 1.442695
        %v492 = vpow.pop %v491
        %v493 = vmul.f32 %v434, 1.442695
        %v494 = vpow.pop %v493
        %v495 = vmul.f32 %v435, 1.442695
        %v496 = vpow.pop %v495
        %v497 = vmul.f32 %v436, 1.442695
        %v498 = vpow.pop %v497
        %v499 = vmul.f32 %v437, 1.442695
        %v500 = vpow.pop %v499
        %v501 = vmul.f32 %v438, 1.442695
        %v502 = vpow.pop %v501
        %v503 = vadd.f32 %v440, 1.0
        %v504 = vadd.f32 %v442, 1.0
        %v505 = vadd.f32 %v444, 1.0
        %v506 = vadd.f32 %v446, 1.0
        %v507 = vadd.f32 %v448, 1.0
        %v508 = vadd.f32 %v450, 1.0
        %v509 = vadd.f32 %v452, 1.0
        %v510 = vadd.f32 %v454, 1.0
        %v511 = vadd.f32 %v456, 1.0
        %v512 = vadd.f32 %v458, 1.0
        %v513 = vadd.f32 %v460, 1.0
        %v514 = vadd.f32 %v462, 1.0
        %v515 = vadd.f32 %v464, 1.0
        %v516 = vadd.f32 %v466, 1.0
        %v517 = vadd.f32 %v468, 1.0
        %v518 = vadd.f32 %v470, 1.0
        %v519 = vadd.f32 %v472, 1.0
        %v520 = vadd.f32 %v474, 1.0
        %v521 = vadd.f32 %v476, 1.0
        %v522 = vadd.f32 %v478, 1.0
        %v523 = vadd.f32 %v480, 1.0
        %v524 = vadd.f32 %v482, 1.0
        %v525 = vadd.f32 %v484, 1.0
        %v526 = vadd.f32 %v486, 1.0
        %v527 = vadd.f32 %v488, 1.0
        %v528 = vadd.f32 %v490, 1.0
        %v529 = vadd.f32 %v492, 1.0
        %v530 = vadd.f32 %v494, 1.0
        %v531 = vadd.f32 %v496, 1.0
        %v532 = vadd.f32 %v498, 1.0
        %v533 = vadd.f32 %v500, 1.0
        %v534 = vadd.f32 %v502, 1.0
        %v535 = vrcp.pop %v503
        %v536 = vmul.f32 1.0, %v535
        %v537 = vrcp.pop %v504
        %v538 = vmul.f32 1.0, %v537
        %v539 = vrcp.pop %v505
        %v540 = vmul.f32 1.0, %v539
        %v541 = vrcp.pop %v506
        %v542 = vmul.f32 1.0, %v541
        %v543 = vrcp.pop %v507
        %v544 = vmul.f32 1.0, %v543
        %v545 = vrcp.pop %v508
        %v546 = vmul.f32 1.0, %v545
        %v547 = vrcp.pop %v509
        %v548 = vmul.f32 1.0, %v547
        %v549 = vrcp.pop %v510
        %v550 = vmul.f32 1.0, %v549
        %v551 = vrcp.pop %v511
        %v552 = vmul.f32 1.0, %v551
        %v553 = vrcp.pop %v512
        %v554 = vmul.f32 1.0, %v553
        %v555 = vrcp.pop %v513
        %v556 = vmul.f32 1.0, %v555
        %v557 = vrcp.pop %v514
        %v558 = vmul.f32 1.0, %v557
        %v559 = vrcp.pop %v515
        %v560 = vmul.f32 1.0, %v559
        %v561 = vrcp.pop %v516
        %v562 = vmul.f32 1.0, %v561
        %v563 = vrcp.pop %v517
        %v564 = vmul.f32 1.0, %v563
        %v565 = vrcp.pop %v518
        %v566 = vmul.f32 1.0, %v565
        %v567 = vrcp.pop %v519
        %v568 = vmul.f32 1.0, %v567
        %v569 = vrcp.pop %v520
        %v570 = vmul.f32 1.0, %v569
        %v571 = vrcp.pop %v521
        %v572 = vmul.f32 1.0, %v571
        %v573 = vrcp.pop %v522
        %v574 = vmul.f32 1.0, %v573
        %v575 = vrcp.pop %v523
        %v576 = vmul.f32 1.0, %v575
        %v577 = vrcp.pop %v524
        %v578 = vmul.f32 1.0, %v577
        %v579 = vrcp.pop %v525
        %v580 = vmul.f32 1.0, %v579
        %v581 = vrcp.pop %v526
        %v582 = vmul.f32 1.0, %v581
        %v583 = vrcp.pop %v527
        %v584 = vmul.f32 1.0, %v583
        %v585 = vrcp.pop %v528
        %v586 = vmul.f32 1.0, %v585
        %v587 = vrcp.pop %v529
        %v588 = vmul.f32 1.0, %v587
        %v589 = vrcp.pop %v530
        %v590 = vmul.f32 1.0, %v589
        %v591 = vrcp.pop %v531
        %v592 = vmul.f32 1.0, %v591
        %v593 = vrcp.pop %v532
        %v594 = vmul.f32 1.0, %v593
        %v595 = vrcp.pop %v533
        %v596 = vmul.f32 1.0, %v595
        %v597 = vrcp.pop %v534
        %v598 = vmul.f32 1.0, %v597
        %599 = vst [vmem:[%s151] sm:$0xff] %v536
        %600 = vst [vmem:[%s151 + $0x8] sm:$0xff] %v538
        %601 = vst [vmem:[%s151 + $0x10] sm:$0xff] %v540
        %602 = vst [vmem:[%s151 + $0x18] sm:$0xff] %v542
        %603 = vst [vmem:[%s151 + $0x20] sm:$0xff] %v544
        %604 = vst [vmem:[%s151 + $0x28] sm:$0xff] %v546
        %605 = vst [vmem:[%s151 + $0x30] sm:$0xff] %v548
        %606 = vst [vmem:[%s151 + $0x38] sm:$0xff] %v550
        %607 = vst [vmem:[%s151 + $0x40] sm:$0xff] %v552
        %608 = vst [vmem:[%s151 + $0x48] sm:$0xff] %v554
        %609 = vst [vmem:[%s151 + $0x50] sm:$0xff] %v556
        %610 = vst [vmem:[%s151 + $0x58] sm:$0xff] %v558
        %611 = vst [vmem:[%s151 + $0x60] sm:$0xff] %v560
        %612 = vst [vmem:[%s151 + $0x68] sm:$0xff] %v562
        %613 = vst [vmem:[%s151 + $0x70] sm:$0xff] %v564
        %614 = vst [vmem:[%s151 + $0x78] sm:$0xff] %v566
        %615 = vst [vmem:[%s151 + $0x80] sm:$0xff] %v568
        %616 = vst [vmem:[%s151 + $0x88] sm:$0xff] %v570
        %617 = vst [vmem:[%s151 + $0x90] sm:$0xff] %v572
        %618 = vst [vmem:[%s151 + $0x98] sm:$0xff] %v574
        %619 = vst [vmem:[%s151 + $0xa0] sm:$0xff] %v576
        %620 = vst [vmem:[%s151 + $0xa8] sm:$0xff] %v578
        %621 = vst [vmem:[%s151 + $0xb0] sm:$0xff] %v580
        %622 = vst [vmem:[%s151 + $0xb8] sm:$0xff] %v582
        %623 = vst [vmem:[%s151 + $0xc0] sm:$0xff] %v584
        %624 = vst [vmem:[%s151 + $0xc8] sm:$0xff] %v586
        %625 = vst [vmem:[%s151 + $0xd0] sm:$0xff] %v588
        %626 = vst [vmem:[%s151 + $0xd8] sm:$0xff] %v590
        %627 = vst [vmem:[%s151 + $0xe0] sm:$0xff] %v592
        %628 = vst [vmem:[%s151 + $0xe8] sm:$0xff] %v594
        %629 = vst [vmem:[%s151 + $0xf0] sm:$0xff] %v596
        %630 = vst [vmem:[%s151 + $0xf8] sm:$0xff] %v598
        %s631 = sand.u32 %s85, 1
        %s632 = scalar_lea.sflag [#allocation3], %s631
        %s633 = sand.u32 %s85, 1
        %s634 = smul.addr %s633, 256
        %s635 = scalar_lea.vmem [#allocation2], %s634
        // Predicated region
        $region29: #{tpu_custom_call.1} parent=27 // pred_check
          %p636 = pneg %p95
        $region30: #{tpu_custom_call.1} parent=27 // pred_check_branch
          %638 = sbr.rel (%p636) target = $region32
        $region31: #{tpu_custom_call.1} parent=27 // pred_region
          %s639 = smul.u32 16, %s20
          %s640 = smul.u32 2, %s21
          %s642 = ssub.s32 4096, 4096
          %643 = vsyncadd %s632, %s642
          %s644 = smul.addr %s639, 2
          %s645 = sadd.s32 %s640, %s644
          %s646 = smul.addr %s645, 128
          %s647 = scalar_lea.hbm %s2, %s646
          %s648 = sshll.u32 %s635, 4
          %s649 = int_to_ptr.vmem [resolvable:$true] %s648
          %654 = dma.vmem_to_hbm [thread:$0]  %s649, 4096, %s647, %s632, 256, 256, 16
        $region32: #{tpu_custom_call.1} parent=27 // pred_fallthru
          _
      $region28: #{tpu_custom_call.1} parent=5 // pred_fallthru
        _
      %p655 = scmp.le.s32.totalorder 2, %s11
      // Predicated region
      $region33: #{tpu_custom_call.1} parent=5 // pred_check
        %p656 = pneg %p655
      $region34: #{tpu_custom_call.1} parent=5 // pred_check_branch
        %658 = sbr.rel (%p656) target = $region36
      $region35: #{tpu_custom_call.1} parent=5 // pred_region
        %s659 = ssub.s32 %s11, 2
        // Predicated region
        $region37: #{tpu_custom_call.1} parent=35 // pred_check
          %p660 = pneg %p101
        $region38: #{tpu_custom_call.1} parent=35 // pred_check_branch
          %662 = sbr.rel (%p660) target = $region40
        $region39: #{tpu_custom_call.1} parent=35 // pred_region
          %s663 = sand.u32 %s86, 1
          %s664 = scalar_lea.sflag [#allocation3], %s663
          %s665 = sand.u32 %s86, 1
          %s666 = smul.addr %s665, 256
          %s667 = scalar_lea.vmem [#allocation2], %s666
          %668 = dma.done %s664, 4096
        $region40: #{tpu_custom_call.1} parent=35 // pred_fallthru
          _
      $region36: #{tpu_custom_call.1} parent=5 // pred_fallthru
        _
    $region6: #{tpu_custom_call.1} parent=1 // loop_footer
      %s15 = sadd.s32 1, %s11
    $region7: #{tpu_custom_call.1} parent=1 // loop_footer_branch
      %10 = sbr.rel target = $region3
    $region8: #{tpu_custom_call.1} parent=1 // loop_exit
      _
    %669 = vsyncpa [#allocation3], 1
    %s670 = scalar_lea.sflag [#allocation3], 1
    %671 = vsyncpa %s670, 1

</llo_original>
